<compile_context>
chip_gen: v5e
topology: v5e:2x2
jax: 0.10.0
libtpu: 0.0.40
codegen_flags: <defaults>
</compile_context>

<pallas_src>
import jax
import jax.numpy as jnp
from jax import lax
from jax.experimental import pallas as pl
from jax.experimental.pallas import tpu as pltpu


def _round_up(x, m):
    return ((x + m - 1) // m) * m


# (peak bf16 matmul flop/s, HBM bytes/s) per TensorCore, by TPU generation.
_CHIP_DB = {
    "v5": (197e12, 0.80e12),
    "v6": (918e12, 1.35e12),
    "v7": (996e12, 3.20e12),
}
_DEFAULT_CHIP = (400e12, 1.00e12)


def _tpu_generation():
    try:
        kind = jax.devices()[0].device_kind.lower()
    except Exception:
        return None
    for gen in ("v7", "v6", "v5"):
        if gen in kind:
            return gen
    return None


def _fused_is_profitable(n_ent, n_rel, dim, table_dtype):
    """Generation/dtype-aware break-even: MXU time of the 3 one-hot gather
    matmuls vs. the HBM round trip (write + re-read of gathered rows) that the
    fused path avoids."""
    peak_bf16, hbm_bw = _CHIP_DB.get(_tpu_generation(), _DEFAULT_CHIP)
    f32_penalty = 3.0 if jnp.dtype(table_dtype).itemsize >= 4 else 1.0
    flops_per_row = 2.0 * (2 * n_ent + n_rel) * (2 * dim)     # 3 one-hot matmuls
    mxu_time = flops_per_row * f32_penalty / peak_bf16
    hbm_bytes_saved = 2.0 * 3 * (2 * dim) * 4                 # write + re-read, f32
    return mxu_time <= hbm_bytes_saved / hbm_bw


def _choose_fused_tile(batch, dim, n_ent, n_rel, table_bytes, vmem_budget):
    """Largest multiple-of-128 batch tile whose fused working set (one-hot
    temporaries + gathered f32 rows + tables, tables counted x2 to stay safe
    even if single-buffering is not honored) fits `vmem_budget`.
    Returns None when nothing fits."""
    vocab_pad = _round_up(max(n_ent, n_rel), 128)
    # Per batch row: int32 iota + compare mask + up to two live one-hot
    # operands over the padded vocab (conservatively 4 B each), plus three
    # gathered (2D,) f32 rows and the elementwise temporaries.
    per_row = 4 * vocab_pad * 4 + (3 * 2 * dim + 2 * dim) * 4
    budget = vmem_budget - 2 * table_bytes
    if budget <= 0:
        return None
    tb = (budget // per_row) // 128 * 128
    if tb < 128:
        return None
    return int(min(tb, 1024, _round_up(batch, 128)))


def _choose_pregather_tile(batch, dim, requested, vmem_budget):
    """Largest multiple-of-128 tile keeping the 6 double-buffered f32 input
    streams of the pre-gathered kernel under `vmem_budget`."""
    bytes_per_row = 6 * 2 * dim * 4
    max_tb = max(128, (vmem_budget // bytes_per_row) // 128 * 128)
    return int(max(128, min(_round_up(requested, 128), max_tb,
                            _round_up(batch, 128))))


def _fused_gather_score_kernel(h_ref, r_ref, t_ref, ent_ref, rel_ref, out_ref):
    """Tables are VMEM-resident (constant index_map, single-buffered).  Rows
    are gathered in-kernel with one one-hot MXU matmul per index against the
    concatenated [real | imag] table, so gathered embeddings never touch HBM.
    The matmul runs in the tables' storage dtype; only the gathered (tb, 2D)
    rows are promoted to f32 (never the full tables)."""
    ent = ent_ref[...]                         # (n_ent, 2D), storage dtype
    rel = rel_ref[...]                         # (n_rel, 2D), storage dtype
    gdt = ent.dtype
    d = ent.shape[1] // 2
    tb = h_ref.shape[0]

    ent_iota = lax.broadcasted_iota(jnp.int32, (tb, ent.shape[0]), 1)
    rel_iota = lax.broadcasted_iota(jnp.int32, (tb, rel.shape[0]), 1)

    def gather(table, iota, idx_col):
        onehot = (idx_col == iota).astype(gdt)          # exact 0/1 in bf16/f32
        return jnp.dot(onehot, table, preferred_element_type=jnp.float32)

    h_cat = gather(ent, ent_iota, h_ref[...])           # (tb, 2D) f32 = [hr|hi]
    t_cat = gather(ent, ent_iota, t_ref[...])           # [tr|ti]
    r_cat = gather(rel, rel_iota, r_ref[...])           # [rr|ri]

    hr, hi = h_cat[:, :d], h_cat[:, d:]
    rr, ri = r_cat[:, :d], r_cat[:, d:]
    tr, ti = t_cat[:, :d], t_cat[:, d:]

    # 6-multiply refactor of the reference 8-multiply form (numerically equal
    # up to f32 summation order; matches PyTorch to ~1e-3, not bitwise).
    partial = tr * (hr * rr + hi * ri) + ti * (hr * ri - hi * rr)   # (tb, D)
    # VPU/XLU row-sum: the MXU is already loaded with the gather matmuls and
    # output traffic is tiny, so the masked (tb, 1) store is negligible.
    out_ref[...] = jnp.sum(partial, axis=-1, keepdims=True)


def _pregathered_score_kernel(hr_ref, hi_ref, rr_ref, ri_ref, tr_ref, ti_ref,
                              out_ref):
    hr = hr_ref[...].astype(jnp.float32)
    hi = hi_ref[...].astype(jnp.float32)
    rr = rr_ref[...].astype(jnp.float32)
    ri = ri_ref[...].astype(jnp.float32)
    tr = tr_ref[...].astype(jnp.float32)
    ti = ti_ref[...].astype(jnp.float32)
    partial = tr * (hr * rr + hi * ri) + ti * (hr * ri - hi * rr)   # (tb, D)
    # Lane-dense (1, tb) output via the otherwise-idle MXU: full-width stores.
    ones = jnp.ones((1, partial.shape[-1]), jnp.float32)
    out_ref[...] = lax.dot_general(
        ones, partial, dimension_numbers=(((1,), (1,)), ((), ())),
        preferred_element_type=jnp.float32)


def complex_score_pallas(heads, relations, tails,
                         entity_real, entity_imag,
                         relation_real, relation_imag,
                         *, fuse_gather=None,
                         table_vmem_budget=4 * 1024 * 1024,
                         fused_vmem_budget=24 * 1024 * 1024):
    """score[b] = ComplEX(heads[b], relations[b], tails[b]); returns (B,) f32."""
    batch = heads.shape[0]
    n_ent, dim = entity_real.shape
    n_rel = relation_real.shape[0]
    itemsize = jnp.dtype(entity_real.dtype).itemsize
    table_bytes = (n_ent + n_rel) * 2 * dim * itemsize
    gen = _tpu_generation()

    if fuse_gather is None:
        fuse_gather = (table_bytes <= table_vmem_budget
                       and _fused_is_profitable(n_ent, n_rel, dim,
                                                entity_real.dtype))
    tb = None
    if fuse_gather:
        # NOTE: on v7x, "parallel" sharding means each TensorCore DMAs its own
        # table copy into its smaller per-TC VMEM; budgets here are per-TC.
        tb = _choose_fused_tile(batch, dim, n_ent, n_rel, table_bytes,
                                fused_vmem_budget)
        if tb is None:
            fuse_gather = False
    if tb is None:
        tb = _choose_pregather_tile(
            batch, dim,
            512 if gen == "v7" else 1024,
            (16 if gen == "v7" else 32) * 1024 * 1024)

    pad_b = _round_up(batch, tb)            # cdiv-style padding, no hard assert
    grid = (pad_b // tb,)

    def _pad_idx(x):
        x = x.astype(jnp.int32).reshape(-1)
        if pad_b != batch:
            x = jnp.concatenate([x, jnp.zeros((pad_b - batch,), jnp.int32)])
        return x.reshape(pad_b, 1)

    h_idx = _pad_idx(heads)
    r_idx = _pad_idx(relations)
    t_idx = _pad_idx(tails)
    idx_spec = pl.BlockSpec((tb, 1), lambda i: (i, 0))

    if fuse_gather:
        # Single concatenated [real | imag] table per vocabulary: one one-hot
        # mask and one MXU matmul per index instead of two.
        ent_cat = jnp.concatenate([entity_real, entity_imag], axis=1)
        rel_cat = jnp.concatenate([relation_real, relation_imag], axis=1)
        ent_spec = pl.BlockSpec((n_ent, 2 * dim), lambda i: (0, 0),
                                pipeline_mode=pl.Buffered(1))
        rel_spec = pl.BlockSpec((n_rel, 2 * dim), lambda i: (0, 0),
                                pipeline_mode=pl.Buffered(1))
        out = pl.pallas_call(
            _fused_gather_score_kernel,
            out_shape=jax.ShapeDtypeStruct((pad_b, 1), jnp.float32),
            grid_spec=pltpu.PrefetchScalarGridSpec(
                num_scalar_prefetch=0,
                grid=grid,
                in_specs=[idx_spec, idx_spec, idx_spec, ent_spec, rel_spec],
                out_specs=pl.BlockSpec((tb, 1), lambda i: (i, 0))),
            compiler_params=pltpu.CompilerParams(
                dimension_semantics=("parallel",),
                vmem_limit_bytes=32 * 1024 * 1024),
        )(h_idx, r_idx, t_idx, ent_cat, rel_cat)
    else:
        # TODO(synk): an in-kernel DMA gather (scalar-prefetched indices +
        # pltpu.make_async_copy from pl.ANY tables) would remove the extra HBM
        # write+read of the pre-gathered rows, but at D=128 each row is only
        # 0.5-1 KiB so per-row DMA descriptor overhead dominates; the XLA
        # pre-gather + big-tile kernel is kept for large vocabularies.
        hq, rq, tq = h_idx[:, 0], r_idx[:, 0], t_idx[:, 0]
        gathered = (jnp.take(entity_real, hq, axis=0),
                    jnp.take(entity_imag, hq, axis=0),
                    jnp.take(relation_real, rq, axis=0),
                    jnp.take(relation_imag, rq, axis=0),
                    jnp.take(entity_real, tq, axis=0),
                    jnp.take(entity_imag, tq, axis=0))
        emb_spec = pl.BlockSpec((tb, dim), lambda i: (i, 0))
        out = pl.pallas_call(
            _pregathered_score_kernel,
            out_shape=jax.ShapeDtypeStruct((1, pad_b), jnp.float32),
            grid_spec=pltpu.PrefetchScalarGridSpec(
                num_scalar_prefetch=0,
                grid=grid,
                in_specs=[emb_spec] * 6,
                out_specs=pl.BlockSpec((1, tb), lambda i: (0, i))),
            compiler_params=pltpu.CompilerParams(
                dimension_semantics=("parallel",),
                vmem_limit_bytes=(32 if gen == "v7" else 64) * 1024 * 1024),
        )(*gathered)

    return out.reshape(-1)[:batch]


class ComplEXPallas:
    """JAX/Pallas port of the PyTorch ComplEX module (forward pass)."""

    def __init__(self, num_entities, num_relations, embedding_dim, key,
                 dtype=jnp.float32):
        k1, k2, k3, k4 = jax.random.split(key, 4)
        # nn.Embedding default init ~ N(0, 1); deterministic synthetic params.
        self.entity_real = jax.random.normal(
            k1, (num_entities, embedding_dim), jnp.float32).astype(dtype)
        self.entity_imag = jax.random.normal(
            k2, (num_entities, embedding_dim), jnp.float32).astype(dtype)
        self.relation_real = jax.random.normal(
            k3, (num_relations, embedding_dim), jnp.float32).astype(dtype)
        self.relation_imag = jax.random.normal(
            k4, (num_relations, embedding_dim), jnp.float32).astype(dtype)

    def forward(self, heads, relations, tails):
        return complex_score_pallas(
            heads, relations, tails,
            self.entity_real, self.entity_imag,
            self.relation_real, self.relation_imag)

    def forward_reference(self, heads, relations, tails):
        hr = jnp.take(self.entity_real, heads, axis=0).astype(jnp.float32)
        hi = jnp.take(self.entity_imag, heads, axis=0).astype(jnp.float32)
        rr = jnp.take(self.relation_real, relations, axis=0).astype(jnp.float32)
        ri = jnp.take(self.relation_imag, relations, axis=0).astype(jnp.float32)
        tr = jnp.take(self.entity_real, tails, axis=0).astype(jnp.float32)
        ti = jnp.take(self.entity_imag, tails, axis=0).astype(jnp.float32)
        score_real = hr * rr * tr + hi * ri * tr
        score_imag = hr * ri * ti - hi * rr * ti
        return score_real.sum(axis=1) + score_imag.sum(axis=1)


if __name__ == "__main__":
    key = jax.random.PRNGKey(0)
    k_params, k_h, k_r, k_t = jax.random.split(key, 4)

    num_entities = 32
    num_relations = 8
    embedding_dim = 128
    batch = 16

    model = ComplEXPallas(num_entities, num_relations, embedding_dim, k_params)

    heads = jax.random.randint(k_h, (batch,), 0, num_entities, dtype=jnp.int32)
    relations = jax.random.randint(k_r, (batch,), 0, num_relations, dtype=jnp.int32)
    tails = jax.random.randint(k_t, (batch,), 0, num_entities, dtype=jnp.int32)

    ref = model.forward_reference(heads, relations, tails)

    # Fused path: tables VMEM-resident, in-kernel one-hot MXU gather.
    score = complex_score_pallas(
        heads, relations, tails,
        model.entity_real, model.entity_imag,
        model.relation_real, model.relation_imag,
        fuse_gather=True)
    jax.block_until_ready(score)
    assert score.shape == (batch,)
    assert jnp.allclose(score, ref, atol=1e-3, rtol=1e-3)

    # Default (auto-selected) path.
    score_auto = model.forward(heads, relations, tails)
    jax.block_until_ready(score_auto)
    assert jnp.allclose(score_auto, ref, atol=1e-3, rtol=1e-3)

    # Large-vocab fallback path: pre-gathered big-tile lane-dense kernel.
    score_fb = complex_score_pallas(
        heads, relations, tails,
        model.entity_real, model.entity_imag,
        model.relation_real, model.relation_imag,
        fuse_gather=False)
    jax.block_until_ready(score_fb)
    assert jnp.allclose(score_fb, ref, atol=1e-3, rtol=1e-3)

    print("KERNEL_OK")
</pallas_src>

<mosaic_0001>
module attributes {stable_mosaic.version = 11 : i64} {
  func.func @_fused_gather_score_kernel(%arg0: i32, %arg1: memref<128x1xi32, #tpu.memory_space<vmem>>, %arg2: memref<128x1xi32, #tpu.memory_space<vmem>>, %arg3: memref<128x1xi32, #tpu.memory_space<vmem>>, %arg4: memref<32x256xf32, #tpu.memory_space<vmem>>, %arg5: memref<8x256xf32, #tpu.memory_space<vmem>>, %arg6: memref<128x1xf32, #tpu.memory_space<vmem>>) attributes {dimension_semantics = [#tpu.dimension_semantics<parallel>], iteration_bounds = array<i64: 1>, scalar_prefetch = 0 : i64, scratch_operands = 0 : i64, tpu.core_type = #tpu.core_type<tc>, window_params = [{transform_indices = @transform_0, window_bounds = array<i64: 128, 1>}, {transform_indices = @transform_1, window_bounds = array<i64: 128, 1>}, {transform_indices = @transform_2, window_bounds = array<i64: 128, 1>}, {pipeline_mode = #tpu.pipeline_mode<synchronous>, transform_indices = @transform_3, window_bounds = array<i64: 32, 256>}, {pipeline_mode = #tpu.pipeline_mode<synchronous>, transform_indices = @transform_4, window_bounds = array<i64: 8, 256>}, {transform_indices = @transform_5, window_bounds = array<i64: 128, 1>}]} {
    %c0 = arith.constant 0 : index
    %c0_0 = arith.constant 0 : index
    %0 = vector.load %arg4[%c0, %c0_0] : memref<32x256xf32, #tpu.memory_space<vmem>>, vector<32x256xf32>
    %c0_1 = arith.constant 0 : index
    %c0_2 = arith.constant 0 : index
    %1 = vector.load %arg5[%c0_1, %c0_2] : memref<8x256xf32, #tpu.memory_space<vmem>>, vector<8x256xf32>
    %2 = tpu.iota {dimensions = array<i32: 1>} : vector<128x32xi32>
    %3 = tpu.iota {dimensions = array<i32: 1>} : vector<128x8xi32>
    %c0_3 = arith.constant 0 : index
    %c0_4 = arith.constant 0 : index
    %4 = vector.load %arg1[%c0_3, %c0_4] : memref<128x1xi32, #tpu.memory_space<vmem>>, vector<128x1xi32>
    %5 = vector.broadcast %4 : vector<128x1xi32> to vector<128x32xi32>
    %6 = arith.cmpi eq, %5, %2 : vector<128x32xi32>
    %7 = arith.extui %6 : vector<128x32xi1> to vector<128x32xi32>
    %8 = arith.sitofp %7 : vector<128x32xi32> to vector<128x32xf32>
    %cst = arith.constant dense<0.000000e+00> : vector<128x256xf32>
    %9 = tpu.matmul %8, %0, %cst {dimension_numbers = #tpu.dot_dimension_numbers<[1], [0], [0], [1], [0, 0, 1, 1], [], []>} : vector<128x32xf32>, vector<32x256xf32>, vector<128x256xf32> -> vector<128x256xf32>
    %c0_5 = arith.constant 0 : index
    %c0_6 = arith.constant 0 : index
    %10 = vector.load %arg3[%c0_5, %c0_6] : memref<128x1xi32, #tpu.memory_space<vmem>>, vector<128x1xi32>
    %11 = vector.broadcast %10 : vector<128x1xi32> to vector<128x32xi32>
    %12 = arith.cmpi eq, %11, %2 : vector<128x32xi32>
    %13 = arith.extui %12 : vector<128x32xi1> to vector<128x32xi32>
    %14 = arith.sitofp %13 : vector<128x32xi32> to vector<128x32xf32>
    %cst_7 = arith.constant dense<0.000000e+00> : vector<128x256xf32>
    %15 = tpu.matmul %14, %0, %cst_7 {dimension_numbers = #tpu.dot_dimension_numbers<[1], [0], [0], [1], [0, 0, 1, 1], [], []>} : vector<128x32xf32>, vector<32x256xf32>, vector<128x256xf32> -> vector<128x256xf32>
    %c0_8 = arith.constant 0 : index
    %c0_9 = arith.constant 0 : index
    %16 = vector.load %arg2[%c0_8, %c0_9] : memref<128x1xi32, #tpu.memory_space<vmem>>, vector<128x1xi32>
    %17 = vector.broadcast %16 : vector<128x1xi32> to vector<128x8xi32>
    %18 = arith.cmpi eq, %17, %3 : vector<128x8xi32>
    %19 = arith.extui %18 : vector<128x8xi1> to vector<128x8xi32>
    %20 = arith.sitofp %19 : vector<128x8xi32> to vector<128x8xf32>
    %cst_10 = arith.constant dense<0.000000e+00> : vector<128x256xf32>
    %21 = tpu.matmul %20, %1, %cst_10 {dimension_numbers = #tpu.dot_dimension_numbers<[1], [0], [0], [1], [0, 0, 1, 1], [], []>} : vector<128x8xf32>, vector<8x256xf32>, vector<128x256xf32> -> vector<128x256xf32>
    %22 = vector.extract_strided_slice %9 {offsets = [0, 0], sizes = [128, 128], strides = [1, 1]} : vector<128x256xf32> to vector<128x128xf32>
    %23 = vector.extract_strided_slice %9 {offsets = [0, 128], sizes = [128, 128], strides = [1, 1]} : vector<128x256xf32> to vector<128x128xf32>
    %24 = vector.extract_strided_slice %21 {offsets = [0, 0], sizes = [128, 128], strides = [1, 1]} : vector<128x256xf32> to vector<128x128xf32>
    %25 = vector.extract_strided_slice %21 {offsets = [0, 128], sizes = [128, 128], strides = [1, 1]} : vector<128x256xf32> to vector<128x128xf32>
    %26 = vector.extract_strided_slice %15 {offsets = [0, 0], sizes = [128, 128], strides = [1, 1]} : vector<128x256xf32> to vector<128x128xf32>
    %27 = vector.extract_strided_slice %15 {offsets = [0, 128], sizes = [128, 128], strides = [1, 1]} : vector<128x256xf32> to vector<128x128xf32>
    %28 = arith.mulf %22, %24 : vector<128x128xf32>
    %29 = arith.mulf %23, %25 : vector<128x128xf32>
    %30 = arith.addf %28, %29 : vector<128x128xf32>
    %31 = arith.mulf %26, %30 : vector<128x128xf32>
    %32 = arith.mulf %22, %25 : vector<128x128xf32>
    %33 = arith.mulf %23, %24 : vector<128x128xf32>
    %34 = arith.subf %32, %33 : vector<128x128xf32>
    %35 = arith.mulf %27, %34 : vector<128x128xf32>
    %36 = arith.addf %31, %35 : vector<128x128xf32>
    %cst_11 = arith.constant dense<0.000000e+00> : vector<128xf32>
    %37 = vector.multi_reduction <add>, %36, %cst_11 [1] : vector<128x128xf32> to vector<128xf32>
    %38 = vector.shape_cast %37 : vector<128xf32> to vector<128x1xf32>
    %c0_12 = arith.constant 0 : index
    %c0_13 = arith.constant 0 : index
    %39 = vector.load %arg6[%c0_12, %c0_13] : memref<128x1xf32, #tpu.memory_space<vmem>>, vector<128x1xf32>
    tpu.vector_store %arg6[%c0_12, %c0_13], %38 {strides = array<i32>} : memref<128x1xf32, #tpu.memory_space<vmem>>, vector<128x1xf32>,
    return
  }
  func.func @transform_0(%arg0: i32) -> (i32, i32) {
    %c0_i32 = arith.constant 0 : i32
    %c0_i32_0 = arith.constant 0 : i32
    return %arg0, %c0_i32 : i32, i32
  }
  func.func @transform_1(%arg0: i32) -> (i32, i32) {
    %c0_i32 = arith.constant 0 : i32
    %c0_i32_0 = arith.constant 0 : i32
    return %arg0, %c0_i32 : i32, i32
  }
  func.func @transform_2(%arg0: i32) -> (i32, i32) {
    %c0_i32 = arith.constant 0 : i32
    %c0_i32_0 = arith.constant 0 : i32
    return %arg0, %c0_i32 : i32, i32
  }
  func.func @transform_3(%arg0: i32) -> (i32, i32) {
    %c0_i32 = arith.constant 0 : i32
    %c0_i32_0 = arith.constant 0 : i32
    %c0_i32_1 = arith.constant 0 : i32
    return %c0_i32, %c0_i32_0 : i32, i32
  }
  func.func @transform_4(%arg0: i32) -> (i32, i32) {
    %c0_i32 = arith.constant 0 : i32
    %c0_i32_0 = arith.constant 0 : i32
    %c0_i32_1 = arith.constant 0 : i32
    return %c0_i32, %c0_i32_0 : i32, i32
  }
  func.func @transform_5(%arg0: i32) -> (i32, i32) {
    %c0_i32 = arith.constant 0 : i32
    %c0_i32_0 = arith.constant 0 : i32
    return %arg0, %c0_i32 : i32, i32
  }
}

</mosaic_0001>

<llo_original>
// kernel: tpu_custom_call.1
$region0: #{tpu_custom_call.1}
  #allocation0 [shape = 'u32[]', space=smem, size = 0x4, offset = 0x4, fixed_abs, tag = 'smem constant byte address 0x4 - core index']
  #allocation1 [shape = 'u32[72,128]{1,0:T(1,128)}', space=vmem, size = 0x9000, scoped, tag = 'internal scratch']
  %s0 = inlined_call_operand.vmem [shape: s32[128,1], index: 0, kind: input, shape index: {}]
  %s1 = inlined_call_operand.vmem [shape: s32[128,1], index: 1, kind: input, shape index: {}]
  %s2 = inlined_call_operand.vmem [shape: s32[128,1], index: 2, kind: input, shape index: {}]
  %s3 = inlined_call_operand.vmem [shape: f32[32,256], index: 3, kind: input, shape index: {}]
  %s4 = inlined_call_operand.vmem [shape: f32[8,256], index: 4, kind: input, shape index: {}]
  %s5 = inlined_call_operand.vmem [shape: f32[128,1], index: 5, kind: output, shape index: {}]
  %s6 = sld [smem:[#allocation0]]
  $region30: #{tpu_custom_call.1} parent=0
    _
  %s8 = ssub.s32 1, %s6
  %s9 = scalar_select 0, %s8, %s6
  // Predicated region
  $region2: #{tpu_custom_call.1} parent=0 // pred_check
    _
  $region3: #{tpu_custom_call.1} parent=0 // pred_check_branch
    %11 = sbr.rel (0) target = $region5
  $region4: #{tpu_custom_call.1} parent=0 // pred_region
    _
  $region5: #{tpu_custom_call.1} parent=0 // pred_fallthru
    _
  // Predicated region
  $region6: #{tpu_custom_call.1} parent=0 // pred_check
    _
  $region7: #{tpu_custom_call.1} parent=0 // pred_check_branch
    %13 = sbr.rel (0) target = $region9
  $region8: #{tpu_custom_call.1} parent=0 // pred_region
    _
  $region9: #{tpu_custom_call.1} parent=0 // pred_fallthru
    _
  // Predicated region
  $region10: #{tpu_custom_call.1} parent=0 // pred_check
    _
  $region11: #{tpu_custom_call.1} parent=0 // pred_check_branch
    %15 = sbr.rel (0) target = $region13
  $region12: #{tpu_custom_call.1} parent=0 // pred_region
    _
  $region13: #{tpu_custom_call.1} parent=0 // pred_fallthru
    _
  // Predicated region
  $region14: #{tpu_custom_call.1} parent=0 // pred_check
    _
  $region15: #{tpu_custom_call.1} parent=0 // pred_check_branch
    %17 = sbr.rel (0) target = $region17
  $region16: #{tpu_custom_call.1} parent=0 // pred_region
    _
  $region17: #{tpu_custom_call.1} parent=0 // pred_fallthru
    _
  // Predicated region
  $region18: #{tpu_custom_call.1} parent=0 // pred_check
    _
  $region19: #{tpu_custom_call.1} parent=0 // pred_check_branch
    %19 = sbr.rel (0) target = $region21
  $region20: #{tpu_custom_call.1} parent=0 // pred_region
    _
  $region21: #{tpu_custom_call.1} parent=0 // pred_fallthru
    _
  %v20 = vld [vmem:[%s3] sm:$0xff]
  %v21 = vld [vmem:[%s3 + $0x8] sm:$0xff]
  %v22 = vld [vmem:[%s3 + $0x10] sm:$0xff]
  %v23 = vld [vmem:[%s3 + $0x18] sm:$0xff]
  %v24 = vld [vmem:[%s3 + $0x20] sm:$0xff]
  %v25 = vld [vmem:[%s3 + $0x28] sm:$0xff]
  %v26 = vld [vmem:[%s3 + $0x30] sm:$0xff]
  %v27 = vld [vmem:[%s3 + $0x38] sm:$0xff]
  %v28 = vld [vmem:[%s4] sm:$0xff]
  %v29 = vld [vmem:[%s4 + $0x8] sm:$0xff]
  %v30 = vlaneseq
  %v31 = vand.u32 %v30, 127
  %v32 = vld [vmem:[%s0] sm:$0xff]
  %v33 = vld [vmem:[%s0 + $0x8] sm:$0xff]
  %v34 = vld [vmem:[%s0 + $0x10] sm:$0xff]
  %v35 = vld [vmem:[%s0 + $0x18] sm:$0xff]
  %v36 = vld [vmem:[%s0 + $0x20] sm:$0xff]
  %v37 = vld [vmem:[%s0 + $0x28] sm:$0xff]
  %v38 = vld [vmem:[%s0 + $0x30] sm:$0xff]
  %v39 = vld [vmem:[%s0 + $0x38] sm:$0xff]
  %v40 = vld [vmem:[%s0 + $0x40] sm:$0xff]
  %v41 = vld [vmem:[%s0 + $0x48] sm:$0xff]
  %v42 = vld [vmem:[%s0 + $0x50] sm:$0xff]
  %v43 = vld [vmem:[%s0 + $0x58] sm:$0xff]
  %v44 = vld [vmem:[%s0 + $0x60] sm:$0xff]
  %v45 = vld [vmem:[%s0 + $0x68] sm:$0xff]
  %v46 = vld [vmem:[%s0 + $0x70] sm:$0xff]
  %v47 = vld [vmem:[%s0 + $0x78] sm:$0xff]
  %48 = vset.pattern.permute.xlu0 0
  %49 = vperm.xlu0 %48, %v32
  %v50 = vpop.permute.xlu0 %49
  %51 = vset.pattern.permute.xlu0 0
  %52 = vperm.xlu0 %51, %v33
  %v53 = vpop.permute.xlu0 %52
  %54 = vset.pattern.permute.xlu0 0
  %55 = vperm.xlu0 %54, %v34
  %v56 = vpop.permute.xlu0 %55
  %57 = vset.pattern.permute.xlu0 0
  %58 = vperm.xlu0 %57, %v35
  %v59 = vpop.permute.xlu0 %58
  %60 = vset.pattern.permute.xlu0 0
  %61 = vperm.xlu0 %60, %v36
  %v62 = vpop.permute.xlu0 %61
  %63 = vset.pattern.permute.xlu0 0
  %64 = vperm.xlu0 %63, %v37
  %v65 = vpop.permute.xlu0 %64
  %66 = vset.pattern.permute.xlu0 0
  %67 = vperm.xlu0 %66, %v38
  %v68 = vpop.permute.xlu0 %67
  %69 = vset.pattern.permute.xlu0 0
  %70 = vperm.xlu0 %69, %v39
  %v71 = vpop.permute.xlu0 %70
  %72 = vset.pattern.permute.xlu0 0
  %73 = vperm.xlu0 %72, %v40
  %v74 = vpop.permute.xlu0 %73
  %75 = vset.pattern.permute.xlu0 0
  %76 = vperm.xlu0 %75, %v41
  %v77 = vpop.permute.xlu0 %76
  %78 = vset.pattern.permute.xlu0 0
  %79 = vperm.xlu0 %78, %v42
  %v80 = vpop.permute.xlu0 %79
  %81 = vset.pattern.permute.xlu0 0
  %82 = vperm.xlu0 %81, %v43
  %v83 = vpop.permute.xlu0 %82
  %84 = vset.pattern.permute.xlu0 0
  %85 = vperm.xlu0 %84, %v44
  %v86 = vpop.permute.xlu0 %85
  %87 = vset.pattern.permute.xlu0 0
  %88 = vperm.xlu0 %87, %v45
  %v89 = vpop.permute.xlu0 %88
  %90 = vset.pattern.permute.xlu0 0
  %91 = vperm.xlu0 %90, %v46
  %v92 = vpop.permute.xlu0 %91
  %93 = vset.pattern.permute.xlu0 0
  %94 = vperm.xlu0 %93, %v47
  %v95 = vpop.permute.xlu0 %94
  %vm96 = vcmp.eq.s32.totalorder %v50, %v31
  %vm97 = vcmp.eq.s32.totalorder %v53, %v31
  %vm98 = vcmp.eq.s32.totalorder %v56, %v31
  %vm99 = vcmp.eq.s32.totalorder %v59, %v31
  %vm100 = vcmp.eq.s32.totalorder %v62, %v31
  %vm101 = vcmp.eq.s32.totalorder %v65, %v31
  %vm102 = vcmp.eq.s32.totalorder %v68, %v31
  %vm103 = vcmp.eq.s32.totalorder %v71, %v31
  %vm104 = vcmp.eq.s32.totalorder %v74, %v31
  %vm105 = vcmp.eq.s32.totalorder %v77, %v31
  %vm106 = vcmp.eq.s32.totalorder %v80, %v31
  %vm107 = vcmp.eq.s32.totalorder %v83, %v31
  %vm108 = vcmp.eq.s32.totalorder %v86, %v31
  %vm109 = vcmp.eq.s32.totalorder %v89, %v31
  %vm110 = vcmp.eq.s32.totalorder %v92, %v31
  %vm111 = vcmp.eq.s32.totalorder %v95, %v31
  %v112 = vsel %vm96, 1, 0
  %v113 = vsel %vm97, 1, 0
  %v114 = vsel %vm98, 1, 0
  %v115 = vsel %vm99, 1, 0
  %v116 = vsel %vm100, 1, 0
  %v117 = vsel %vm101, 1, 0
  %v118 = vsel %vm102, 1, 0
  %v119 = vsel %vm103, 1, 0
  %v120 = vsel %vm104, 1, 0
  %v121 = vsel %vm105, 1, 0
  %v122 = vsel %vm106, 1, 0
  %v123 = vsel %vm107, 1, 0
  %v124 = vsel %vm108, 1, 0
  %v125 = vsel %vm109, 1, 0
  %v126 = vsel %vm110, 1, 0
  %v127 = vsel %vm111, 1, 0
  %v128 = vcvt.s32.f32 %v112
  %v129 = vcvt.s32.f32 %v113
  %v130 = vcvt.s32.f32 %v114
  %v131 = vcvt.s32.f32 %v115
  %v132 = vcvt.s32.f32 %v116
  %v133 = vcvt.s32.f32 %v117
  %v134 = vcvt.s32.f32 %v118
  %v135 = vcvt.s32.f32 %v119
  %v136 = vcvt.s32.f32 %v120
  %v137 = vcvt.s32.f32 %v121
  %v138 = vcvt.s32.f32 %v122
  %v139 = vcvt.s32.f32 %v123
  %v140 = vcvt.s32.f32 %v124
  %v141 = vcvt.s32.f32 %v125
  %v142 = vcvt.s32.f32 %v126
  %v143 = vcvt.s32.f32 %v127
  %vm144 = vcmask 261120
  %v146 = vsel %vm144, %v128, 0
  %v149 = vsel %vm144, %v129, 0
  %v152 = vsel %vm144, %v130, 0
  %v155 = vsel %vm144, %v131, 0
  %v158 = vsel %vm144, %v132, 0
  %v161 = vsel %vm144, %v133, 0
  %v164 = vsel %vm144, %v134, 0
  %v167 = vsel %vm144, %v135, 0
  %v170 = vsel %vm144, %v136, 0
  %v173 = vsel %vm144, %v137, 0
  %v176 = vsel %vm144, %v138, 0
  %v179 = vsel %vm144, %v139, 0
  %v182 = vsel %vm144, %v140, 0
  %v185 = vsel %vm144, %v141, 0
  %v188 = vsel %vm144, %v142, 0
  %v191 = vsel %vm144, %v143, 0
  %193 = vmatpush.msra.mxu0 0.0
  %194 = vmatpush.msra.mxu0 0.0
  %195 = vmatpush.msra.mxu0 0.0
  %196 = vmatpush.msra.mxu0 0.0
  %197 = vmatpush.msra.mxu0 0.0
  %198 = vmatpush.msra.mxu0 0.0
  %199 = vmatpush.msra.mxu0 0.0
  %200 = vmatpush.msra.mxu0 0.0
  %201 = vmatpush.msra.mxu0 0.0
  %202 = vmatpush.msra.mxu0 0.0
  %203 = vmatpush.msra.mxu0 0.0
  %204 = vmatpush.msra.mxu0 0.0
  %205 = vmatpush.msra.mxu0 %v26
  %206 = vmatpush.msra.mxu0 %v24
  %207 = vmatpush.msra.mxu0 %v22
  %208 = vmatpush.msra.mxu0 %v20
  %209 = vmatmul.f32.gmra.mxu0 %v146
  %v210 = vpop.f32.mrf.mxu0
  %v211 = vadd.f32 0.0, %v210
  %212 = vmatmul.f32.gmra.mxu0 %v149
  %v213 = vpop.f32.mrf.mxu0
  %v214 = vadd.f32 0.0, %v213
  %215 = vmatmul.f32.gmra.mxu0 %v152
  %v216 = vpop.f32.mrf.mxu0
  %v217 = vadd.f32 0.0, %v216
  %218 = vmatmul.f32.gmra.mxu0 %v155
  %v219 = vpop.f32.mrf.mxu0
  %v220 = vadd.f32 0.0, %v219
  %221 = vmatmul.f32.gmra.mxu0 %v158
  %v222 = vpop.f32.mrf.mxu0
  %v223 = vadd.f32 0.0, %v222
  %224 = vmatmul.f32.gmra.mxu0 %v161
  %v225 = vpop.f32.mrf.mxu0
  %v226 = vadd.f32 0.0, %v225
  %227 = vmatmul.f32.gmra.mxu0 %v164
  %v228 = vpop.f32.mrf.mxu0
  %v229 = vadd.f32 0.0, %v228
  %230 = vmatmul.f32.gmra.mxu0 %v167
  %v231 = vpop.f32.mrf.mxu0
  %v232 = vadd.f32 0.0, %v231
  %233 = vmatmul.f32.gmra.mxu0 %v170
  %v234 = vpop.f32.mrf.mxu0
  %v235 = vadd.f32 0.0, %v234
  %236 = vmatmul.f32.gmra.mxu0 %v173
  %v237 = vpop.f32.mrf.mxu0
  %v238 = vadd.f32 0.0, %v237
  %239 = vmatmul.f32.gmra.mxu0 %v176
  %v240 = vpop.f32.mrf.mxu0
  %v241 = vadd.f32 0.0, %v240
  %242 = vmatmul.f32.gmra.mxu0 %v179
  %v243 = vpop.f32.mrf.mxu0
  %v244 = vadd.f32 0.0, %v243
  %245 = vmatmul.f32.gmra.mxu0 %v182
  %v246 = vpop.f32.mrf.mxu0
  %v247 = vadd.f32 0.0, %v246
  %248 = vmatmul.f32.gmra.mxu0 %v185
  %v249 = vpop.f32.mrf.mxu0
  %v250 = vadd.f32 0.0, %v249
  %251 = vmatmul.f32.gmra.mxu0 %v188
  %v252 = vpop.f32.mrf.mxu0
  %v253 = vadd.f32 0.0, %v252
  %254 = vmatmul.f32.gmra.mxu0 %v191
  %v255 = vpop.f32.mrf.mxu0
  %v256 = vadd.f32 0.0, %v255
  %257 = vdwg.mxu0
  %258 = vmatpush.msra.mxu0 0.0
  %259 = vmatpush.msra.mxu0 0.0
  %260 = vmatpush.msra.mxu0 0.0
  %261 = vmatpush.msra.mxu0 0.0
  %262 = vmatpush.msra.mxu0 0.0
  %263 = vmatpush.msra.mxu0 0.0
  %264 = vmatpush.msra.mxu0 0.0
  %265 = vmatpush.msra.mxu0 0.0
  %266 = vmatpush.msra.mxu0 0.0
  %267 = vmatpush.msra.mxu0 0.0
  %268 = vmatpush.msra.mxu0 0.0
  %269 = vmatpush.msra.mxu0 0.0
  %270 = vmatpush.msra.mxu0 %v27
  %271 = vmatpush.msra.mxu0 %v25
  %272 = vmatpush.msra.mxu0 %v23
  %273 = vmatpush.msra.mxu0 %v21
  %274 = vmatmul.f32.gmra.mxu0 %v146
  %v275 = vpop.f32.mrf.mxu0
  %v276 = vadd.f32 0.0, %v275
  %277 = vmatmul.f32.gmra.mxu0 %v149
  %v278 = vpop.f32.mrf.mxu0
  %v279 = vadd.f32 0.0, %v278
  %280 = vmatmul.f32.gmra.mxu0 %v152
  %v281 = vpop.f32.mrf.mxu0
  %v282 = vadd.f32 0.0, %v281
  %283 = vmatmul.f32.gmra.mxu0 %v155
  %v284 = vpop.f32.mrf.mxu0
  %v285 = vadd.f32 0.0, %v284
  %286 = vmatmul.f32.gmra.mxu0 %v158
  %v287 = vpop.f32.mrf.mxu0
  %v288 = vadd.f32 0.0, %v287
  %289 = vmatmul.f32.gmra.mxu0 %v161
  %v290 = vpop.f32.mrf.mxu0
  %v291 = vadd.f32 0.0, %v290
  %292 = vmatmul.f32.gmra.mxu0 %v164
  %v293 = vpop.f32.mrf.mxu0
  %v294 = vadd.f32 0.0, %v293
  %295 = vmatmul.f32.gmra.mxu0 %v167
  %v296 = vpop.f32.mrf.mxu0
  %v297 = vadd.f32 0.0, %v296
  %298 = vmatmul.f32.gmra.mxu0 %v170
  %v299 = vpop.f32.mrf.mxu0
  %v300 = vadd.f32 0.0, %v299
  %301 = vmatmul.f32.gmra.mxu0 %v173
  %v302 = vpop.f32.mrf.mxu0
  %v303 = vadd.f32 0.0, %v302
  %304 = vmatmul.f32.gmra.mxu0 %v176
  %v305 = vpop.f32.mrf.mxu0
  %v306 = vadd.f32 0.0, %v305
  %307 = vmatmul.f32.gmra.mxu0 %v179
  %v308 = vpop.f32.mrf.mxu0
  %v309 = vadd.f32 0.0, %v308
  %310 = vmatmul.f32.gmra.mxu0 %v182
  %v311 = vpop.f32.mrf.mxu0
  %v312 = vadd.f32 0.0, %v311
  %313 = vmatmul.f32.gmra.mxu0 %v185
  %v314 = vpop.f32.mrf.mxu0
  %v315 = vadd.f32 0.0, %v314
  %316 = vmatmul.f32.gmra.mxu0 %v188
  %v317 = vpop.f32.mrf.mxu0
  %v318 = vadd.f32 0.0, %v317
  %319 = vmatmul.f32.gmra.mxu0 %v191
  %v320 = vpop.f32.mrf.mxu0
  %v321 = vadd.f32 0.0, %v320
  %322 = vdwg.mxu0
  %v323 = vld [vmem:[%s2] sm:$0xff]
  %v324 = vld [vmem:[%s2 + $0x8] sm:$0xff]
  %v325 = vld [vmem:[%s2 + $0x10] sm:$0xff]
  %v326 = vld [vmem:[%s2 + $0x18] sm:$0xff]
  %v327 = vld [vmem:[%s2 + $0x20] sm:$0xff]
  %v328 = vld [vmem:[%s2 + $0x28] sm:$0xff]
  %v329 = vld [vmem:[%s2 + $0x30] sm:$0xff]
  %v330 = vld [vmem:[%s2 + $0x38] sm:$0xff]
  %v331 = vld [vmem:[%s2 + $0x40] sm:$0xff]
  %v332 = vld [vmem:[%s2 + $0x48] sm:$0xff]
  %v333 = vld [vmem:[%s2 + $0x50] sm:$0xff]
  %v334 = vld [vmem:[%s2 + $0x58] sm:$0xff]
  %v335 = vld [vmem:[%s2 + $0x60] sm:$0xff]
  %v336 = vld [vmem:[%s2 + $0x68] sm:$0xff]
  %v337 = vld [vmem:[%s2 + $0x70] sm:$0xff]
  %v338 = vld [vmem:[%s2 + $0x78] sm:$0xff]
  %339 = vset.pattern.permute.xlu0 0
  %340 = vperm.xlu0 %339, %v323
  %v341 = vpop.permute.xlu0 %340
  %342 = vset.pattern.permute.xlu0 0
  %343 = vperm.xlu0 %342, %v324
  %v344 = vpop.permute.xlu0 %343
  %345 = vset.pattern.permute.xlu0 0
  %346 = vperm.xlu0 %345, %v325
  %v347 = vpop.permute.xlu0 %346
  %348 = vset.pattern.permute.xlu0 0
  %349 = vperm.xlu0 %348, %v326
  %v350 = vpop.permute.xlu0 %349
  %351 = vset.pattern.permute.xlu0 0
  %352 = vperm.xlu0 %351, %v327
  %v353 = vpop.permute.xlu0 %352
  %354 = vset.pattern.permute.xlu0 0
  %355 = vperm.xlu0 %354, %v328
  %v356 = vpop.permute.xlu0 %355
  %357 = vset.pattern.permute.xlu0 0
  %358 = vperm.xlu0 %357, %v329
  %v359 = vpop.permute.xlu0 %358
  %360 = vset.pattern.permute.xlu0 0
  %361 = vperm.xlu0 %360, %v330
  %v362 = vpop.permute.xlu0 %361
  %363 = vset.pattern.permute.xlu0 0
  %364 = vperm.xlu0 %363, %v331
  %v365 = vpop.permute.xlu0 %364
  %366 = vset.pattern.permute.xlu0 0
  %367 = vperm.xlu0 %366, %v332
  %v368 = vpop.permute.xlu0 %367
  %369 = vset.pattern.permute.xlu0 0
  %370 = vperm.xlu0 %369, %v333
  %v371 = vpop.permute.xlu0 %370
  %372 = vset.pattern.permute.xlu0 0
  %373 = vperm.xlu0 %372, %v334
  %v374 = vpop.permute.xlu0 %373
  %375 = vset.pattern.permute.xlu0 0
  %376 = vperm.xlu0 %375, %v335
  %v377 = vpop.permute.xlu0 %376
  %378 = vset.pattern.permute.xlu0 0
  %379 = vperm.xlu0 %378, %v336
  %v380 = vpop.permute.xlu0 %379
  %381 = vset.pattern.permute.xlu0 0
  %382 = vperm.xlu0 %381, %v337
  %v383 = vpop.permute.xlu0 %382
  %384 = vset.pattern.permute.xlu0 0
  %385 = vperm.xlu0 %384, %v338
  %v386 = vpop.permute.xlu0 %385
  %vm387 = vcmp.eq.s32.totalorder %v341, %v31
  %vm388 = vcmp.eq.s32.totalorder %v344, %v31
  %vm389 = vcmp.eq.s32.totalorder %v347, %v31
  %vm390 = vcmp.eq.s32.totalorder %v350, %v31
  %vm391 = vcmp.eq.s32.totalorder %v353, %v31
  %vm392 = vcmp.eq.s32.totalorder %v356, %v31
  %vm393 = vcmp.eq.s32.totalorder %v359, %v31
  %vm394 = vcmp.eq.s32.totalorder %v362, %v31
  %vm395 = vcmp.eq.s32.totalorder %v365, %v31
  %vm396 = vcmp.eq.s32.totalorder %v368, %v31
  %vm397 = vcmp.eq.s32.totalorder %v371, %v31
  %vm398 = vcmp.eq.s32.totalorder %v374, %v31
  %vm399 = vcmp.eq.s32.totalorder %v377, %v31
  %vm400 = vcmp.eq.s32.totalorder %v380, %v31
  %vm401 = vcmp.eq.s32.totalorder %v383, %v31
  %vm402 = vcmp.eq.s32.totalorder %v386, %v31
  %v403 = vsel %vm387, 1, 0
  %v404 = vsel %vm388, 1, 0
  %v405 = vsel %vm389, 1, 0
  %v406 = vsel %vm390, 1, 0
  %v407 = vsel %vm391, 1, 0
  %v408 = vsel %vm392, 1, 0
  %v409 = vsel %vm393, 1, 0
  %v410 = vsel %vm394, 1, 0
  %v411 = vsel %vm395, 1, 0
  %v412 = vsel %vm396, 1, 0
  %v413 = vsel %vm397, 1, 0
  %v414 = vsel %vm398, 1, 0
  %v415 = vsel %vm399, 1, 0
  %v416 = vsel %vm400, 1, 0
  %v417 = vsel %vm401, 1, 0
  %v418 = vsel %vm402, 1, 0
  %v419 = vcvt.s32.f32 %v403
  %v420 = vcvt.s32.f32 %v404
  %v421 = vcvt.s32.f32 %v405
  %v422 = vcvt.s32.f32 %v406
  %v423 = vcvt.s32.f32 %v407
  %v424 = vcvt.s32.f32 %v408
  %v425 = vcvt.s32.f32 %v409
  %v426 = vcvt.s32.f32 %v410
  %v427 = vcvt.s32.f32 %v411
  %v428 = vcvt.s32.f32 %v412
  %v429 = vcvt.s32.f32 %v413
  %v430 = vcvt.s32.f32 %v414
  %v431 = vcvt.s32.f32 %v415
  %v432 = vcvt.s32.f32 %v416
  %v433 = vcvt.s32.f32 %v417
  %v434 = vcvt.s32.f32 %v418
  %v436 = vsel %vm144, %v419, 0
  %v439 = vsel %vm144, %v420, 0
  %v442 = vsel %vm144, %v421, 0
  %v445 = vsel %vm144, %v422, 0
  %v448 = vsel %vm144, %v423, 0
  %v451 = vsel %vm144, %v424, 0
  %v454 = vsel %vm144, %v425, 0
  %v457 = vsel %vm144, %v426, 0
  %v460 = vsel %vm144, %v427, 0
  %v463 = vsel %vm144, %v428, 0
  %v466 = vsel %vm144, %v429, 0
  %v469 = vsel %vm144, %v430, 0
  %v472 = vsel %vm144, %v431, 0
  %v475 = vsel %vm144, %v432, 0
  %v478 = vsel %vm144, %v433, 0
  %v481 = vsel %vm144, %v434, 0
  %483 = vmatpush.msra.mxu0 0.0
  %484 = vmatpush.msra.mxu0 0.0
  %485 = vmatpush.msra.mxu0 0.0
  %486 = vmatpush.msra.mxu0 0.0
  %487 = vmatpush.msra.mxu0 0.0
  %488 = vmatpush.msra.mxu0 0.0
  %489 = vmatpush.msra.mxu0 0.0
  %490 = vmatpush.msra.mxu0 0.0
  %491 = vmatpush.msra.mxu0 0.0
  %492 = vmatpush.msra.mxu0 0.0
  %493 = vmatpush.msra.mxu0 0.0
  %494 = vmatpush.msra.mxu0 0.0
  %495 = vmatpush.msra.mxu0 %v26
  %496 = vmatpush.msra.mxu0 %v24
  %497 = vmatpush.msra.mxu0 %v22
  %498 = vmatpush.msra.mxu0 %v20
  %499 = vmatmul.f32.gmra.mxu0 %v436
  %v500 = vpop.f32.mrf.mxu0
  %v501 = vadd.f32 0.0, %v500
  %502 = vmatmul.f32.gmra.mxu0 %v439
  %v503 = vpop.f32.mrf.mxu0
  %v504 = vadd.f32 0.0, %v503
  %505 = vmatmul.f32.gmra.mxu0 %v442
  %v506 = vpop.f32.mrf.mxu0
  %v507 = vadd.f32 0.0, %v506
  %508 = vmatmul.f32.gmra.mxu0 %v445
  %v509 = vpop.f32.mrf.mxu0
  %v510 = vadd.f32 0.0, %v509
  %511 = vmatmul.f32.gmra.mxu0 %v448
  %v512 = vpop.f32.mrf.mxu0
  %v513 = vadd.f32 0.0, %v512
  %514 = vmatmul.f32.gmra.mxu0 %v451
  %v515 = vpop.f32.mrf.mxu0
  %v516 = vadd.f32 0.0, %v515
  %517 = vmatmul.f32.gmra.mxu0 %v454
  %v518 = vpop.f32.mrf.mxu0
  %v519 = vadd.f32 0.0, %v518
  %520 = vmatmul.f32.gmra.mxu0 %v457
  %v521 = vpop.f32.mrf.mxu0
  %v522 = vadd.f32 0.0, %v521
  %523 = vmatmul.f32.gmra.mxu0 %v460
  %v524 = vpop.f32.mrf.mxu0
  %v525 = vadd.f32 0.0, %v524
  %526 = vmatmul.f32.gmra.mxu0 %v463
  %v527 = vpop.f32.mrf.mxu0
  %v528 = vadd.f32 0.0, %v527
  %529 = vmatmul.f32.gmra.mxu0 %v466
  %v530 = vpop.f32.mrf.mxu0
  %v531 = vadd.f32 0.0, %v530
  %532 = vmatmul.f32.gmra.mxu0 %v469
  %v533 = vpop.f32.mrf.mxu0
  %v534 = vadd.f32 0.0, %v533
  %535 = vmatmul.f32.gmra.mxu0 %v472
  %v536 = vpop.f32.mrf.mxu0
  %v537 = vadd.f32 0.0, %v536
  %538 = vmatmul.f32.gmra.mxu0 %v475
  %v539 = vpop.f32.mrf.mxu0
  %v540 = vadd.f32 0.0, %v539
  %541 = vmatmul.f32.gmra.mxu0 %v478
  %v542 = vpop.f32.mrf.mxu0
  %v543 = vadd.f32 0.0, %v542
  %544 = vmatmul.f32.gmra.mxu0 %v481
  %v545 = vpop.f32.mrf.mxu0
  %v546 = vadd.f32 0.0, %v545
  %547 = vdwg.mxu0
  %548 = vmatpush.msra.mxu0 0.0
  %549 = vmatpush.msra.mxu0 0.0
  %550 = vmatpush.msra.mxu0 0.0
  %551 = vmatpush.msra.mxu0 0.0
  %552 = vmatpush.msra.mxu0 0.0
  %553 = vmatpush.msra.mxu0 0.0
  %554 = vmatpush.msra.mxu0 0.0
  %555 = vmatpush.msra.mxu0 0.0
  %556 = vmatpush.msra.mxu0 0.0
  %557 = vmatpush.msra.mxu0 0.0
  %558 = vmatpush.msra.mxu0 0.0
  %559 = vmatpush.msra.mxu0 0.0
  %560 = vmatpush.msra.mxu0 %v27
  %561 = vmatpush.msra.mxu0 %v25
  %562 = vmatpush.msra.mxu0 %v23
  %563 = vmatpush.msra.mxu0 %v21
  %564 = vmatmul.f32.gmra.mxu0 %v436
  %v565 = vpop.f32.mrf.mxu0
  %v566 = vadd.f32 0.0, %v565
  %567 = vmatmul.f32.gmra.mxu0 %v439
  %v568 = vpop.f32.mrf.mxu0
  %v569 = vadd.f32 0.0, %v568
  %570 = vmatmul.f32.gmra.mxu0 %v442
  %v571 = vpop.f32.mrf.mxu0
  %v572 = vadd.f32 0.0, %v571
  %573 = vmatmul.f32.gmra.mxu0 %v445
  %v574 = vpop.f32.mrf.mxu0
  %v575 = vadd.f32 0.0, %v574
  %576 = vmatmul.f32.gmra.mxu0 %v448
  %v577 = vpop.f32.mrf.mxu0
  %v578 = vadd.f32 0.0, %v577
  %579 = vmatmul.f32.gmra.mxu0 %v451
  %v580 = vpop.f32.mrf.mxu0
  %v581 = vadd.f32 0.0, %v580
  %582 = vmatmul.f32.gmra.mxu0 %v454
  %v583 = vpop.f32.mrf.mxu0
  %v584 = vadd.f32 0.0, %v583
  %585 = vmatmul.f32.gmra.mxu0 %v457
  %v586 = vpop.f32.mrf.mxu0
  %v587 = vadd.f32 0.0, %v586
  %588 = vmatmul.f32.gmra.mxu0 %v460
  %v589 = vpop.f32.mrf.mxu0
  %v590 = vadd.f32 0.0, %v589
  %591 = vmatmul.f32.gmra.mxu0 %v463
  %v592 = vpop.f32.mrf.mxu0
  %v593 = vadd.f32 0.0, %v592
  %594 = vmatmul.f32.gmra.mxu0 %v466
  %v595 = vpop.f32.mrf.mxu0
  %v596 = vadd.f32 0.0, %v595
  %597 = vmatmul.f32.gmra.mxu0 %v469
  %v598 = vpop.f32.mrf.mxu0
  %v599 = vadd.f32 0.0, %v598
  %600 = vmatmul.f32.gmra.mxu0 %v472
  %v601 = vpop.f32.mrf.mxu0
  %v602 = vadd.f32 0.0, %v601
  %603 = vmatmul.f32.gmra.mxu0 %v475
  %v604 = vpop.f32.mrf.mxu0
  %v605 = vadd.f32 0.0, %v604
  %606 = vmatmul.f32.gmra.mxu0 %v478
  %v607 = vpop.f32.mrf.mxu0
  %v608 = vadd.f32 0.0, %v607
  %609 = vmatmul.f32.gmra.mxu0 %v481
  %v610 = vpop.f32.mrf.mxu0
  %v611 = vadd.f32 0.0, %v610
  %612 = vdwg.mxu0
  %v613 = vld [vmem:[%s1] sm:$0xff]
  %v614 = vld [vmem:[%s1 + $0x8] sm:$0xff]
  %v615 = vld [vmem:[%s1 + $0x10] sm:$0xff]
  %v616 = vld [vmem:[%s1 + $0x18] sm:$0xff]
  %v617 = vld [vmem:[%s1 + $0x20] sm:$0xff]
  %v618 = vld [vmem:[%s1 + $0x28] sm:$0xff]
  %v619 = vld [vmem:[%s1 + $0x30] sm:$0xff]
  %v620 = vld [vmem:[%s1 + $0x38] sm:$0xff]
  %v621 = vld [vmem:[%s1 + $0x40] sm:$0xff]
  %v622 = vld [vmem:[%s1 + $0x48] sm:$0xff]
  %v623 = vld [vmem:[%s1 + $0x50] sm:$0xff]
  %v624 = vld [vmem:[%s1 + $0x58] sm:$0xff]
  %v625 = vld [vmem:[%s1 + $0x60] sm:$0xff]
  %v626 = vld [vmem:[%s1 + $0x68] sm:$0xff]
  %v627 = vld [vmem:[%s1 + $0x70] sm:$0xff]
  %v628 = vld [vmem:[%s1 + $0x78] sm:$0xff]
  %629 = vset.pattern.permute.xlu0 0
  %630 = vperm.xlu0 %629, %v613
  %v631 = vpop.permute.xlu0 %630
  %632 = vset.pattern.permute.xlu0 0
  %633 = vperm.xlu0 %632, %v614
  %v634 = vpop.permute.xlu0 %633
  %635 = vset.pattern.permute.xlu0 0
  %636 = vperm.xlu0 %635, %v615
  %v637 = vpop.permute.xlu0 %636
  %638 = vset.pattern.permute.xlu0 0
  %639 = vperm.xlu0 %638, %v616
  %v640 = vpop.permute.xlu0 %639
  %641 = vset.pattern.permute.xlu0 0
  %642 = vperm.xlu0 %641, %v617
  %v643 = vpop.permute.xlu0 %642
  %644 = vset.pattern.permute.xlu0 0
  %645 = vperm.xlu0 %644, %v618
  %v646 = vpop.permute.xlu0 %645
  %647 = vset.pattern.permute.xlu0 0
  %648 = vperm.xlu0 %647, %v619
  %v649 = vpop.permute.xlu0 %648
  %650 = vset.pattern.permute.xlu0 0
  %651 = vperm.xlu0 %650, %v620
  %v652 = vpop.permute.xlu0 %651
  %653 = vset.pattern.permute.xlu0 0
  %654 = vperm.xlu0 %653, %v621
  %v655 = vpop.permute.xlu0 %654
  %656 = vset.pattern.permute.xlu0 0
  %657 = vperm.xlu0 %656, %v622
  %v658 = vpop.permute.xlu0 %657
  %659 = vset.pattern.permute.xlu0 0
  %660 = vperm.xlu0 %659, %v623
  %v661 = vpop.permute.xlu0 %660
  %662 = vset.pattern.permute.xlu0 0
  %663 = vperm.xlu0 %662, %v624
  %v664 = vpop.permute.xlu0 %663
  %665 = vset.pattern.permute.xlu0 0
  %666 = vperm.xlu0 %665, %v625
  %v667 = vpop.permute.xlu0 %666
  %668 = vset.pattern.permute.xlu0 0
  %669 = vperm.xlu0 %668, %v626
  %v670 = vpop.permute.xlu0 %669
  %671 = vset.pattern.permute.xlu0 0
  %672 = vperm.xlu0 %671, %v627
  %v673 = vpop.permute.xlu0 %672
  %674 = vset.pattern.permute.xlu0 0
  %675 = vperm.xlu0 %674, %v628
  %v676 = vpop.permute.xlu0 %675
  %vm677 = vcmp.eq.s32.totalorder %v631, %v31
  %vm678 = vcmp.eq.s32.totalorder %v634, %v31
  %vm679 = vcmp.eq.s32.totalorder %v637, %v31
  %vm680 = vcmp.eq.s32.totalorder %v640, %v31
  %vm681 = vcmp.eq.s32.totalorder %v643, %v31
  %vm682 = vcmp.eq.s32.totalorder %v646, %v31
  %vm683 = vcmp.eq.s32.totalorder %v649, %v31
  %vm684 = vcmp.eq.s32.totalorder %v652, %v31
  %vm685 = vcmp.eq.s32.totalorder %v655, %v31
  %vm686 = vcmp.eq.s32.totalorder %v658, %v31
  %vm687 = vcmp.eq.s32.totalorder %v661, %v31
  %vm688 = vcmp.eq.s32.totalorder %v664, %v31
  %vm689 = vcmp.eq.s32.totalorder %v667, %v31
  %vm690 = vcmp.eq.s32.totalorder %v670, %v31
  %vm691 = vcmp.eq.s32.totalorder %v673, %v31
  %vm692 = vcmp.eq.s32.totalorder %v676, %v31
  %v693 = vsel %vm677, 1, 0
  %v694 = vsel %vm678, 1, 0
  %v695 = vsel %vm679, 1, 0
  %v696 = vsel %vm680, 1, 0
  %v697 = vsel %vm681, 1, 0
  %v698 = vsel %vm682, 1, 0
  %v699 = vsel %vm683, 1, 0
  %v700 = vsel %vm684, 1, 0
  %v701 = vsel %vm685, 1, 0
  %v702 = vsel %vm686, 1, 0
  %v703 = vsel %vm687, 1, 0
  %v704 = vsel %vm688, 1, 0
  %v705 = vsel %vm689, 1, 0
  %v706 = vsel %vm690, 1, 0
  %v707 = vsel %vm691, 1, 0
  %v708 = vsel %vm692, 1, 0
  %v709 = vcvt.s32.f32 %v693
  %v710 = vcvt.s32.f32 %v694
  %v711 = vcvt.s32.f32 %v695
  %v712 = vcvt.s32.f32 %v696
  %v713 = vcvt.s32.f32 %v697
  %v714 = vcvt.s32.f32 %v698
  %v715 = vcvt.s32.f32 %v699
  %v716 = vcvt.s32.f32 %v700
  %v717 = vcvt.s32.f32 %v701
  %v718 = vcvt.s32.f32 %v702
  %v719 = vcvt.s32.f32 %v703
  %v720 = vcvt.s32.f32 %v704
  %v721 = vcvt.s32.f32 %v705
  %v722 = vcvt.s32.f32 %v706
  %v723 = vcvt.s32.f32 %v707
  %v724 = vcvt.s32.f32 %v708
  %vm725 = vcmask 64512
  %v727 = vsel %vm725, %v709, 0
  %v730 = vsel %vm725, %v710, 0
  %v733 = vsel %vm725, %v711, 0
  %v736 = vsel %vm725, %v712, 0
  %v739 = vsel %vm725, %v713, 0
  %v742 = vsel %vm725, %v714, 0
  %v745 = vsel %vm725, %v715, 0
  %v748 = vsel %vm725, %v716, 0
  %v751 = vsel %vm725, %v717, 0
  %v754 = vsel %vm725, %v718, 0
  %v757 = vsel %vm725, %v719, 0
  %v760 = vsel %vm725, %v720, 0
  %v763 = vsel %vm725, %v721, 0
  %v766 = vsel %vm725, %v722, 0
  %v769 = vsel %vm725, %v723, 0
  %v772 = vsel %vm725, %v724, 0
  %774 = vmatpush.msra.mxu0 0.0
  %775 = vmatpush.msra.mxu0 0.0
  %776 = vmatpush.msra.mxu0 0.0
  %777 = vmatpush.msra.mxu0 0.0
  %778 = vmatpush.msra.mxu0 0.0
  %779 = vmatpush.msra.mxu0 0.0
  %780 = vmatpush.msra.mxu0 0.0
  %781 = vmatpush.msra.mxu0 0.0
  %782 = vmatpush.msra.mxu0 0.0
  %783 = vmatpush.msra.mxu0 0.0
  %784 = vmatpush.msra.mxu0 0.0
  %785 = vmatpush.msra.mxu0 0.0
  %786 = vmatpush.msra.mxu0 0.0
  %787 = vmatpush.msra.mxu0 0.0
  %788 = vmatpush.msra.mxu0 0.0
  %789 = vmatpush.msra.mxu0 %v28
  %790 = vmatmul.f32.gmra.mxu0 %v727
  %v791 = vpop.f32.mrf.mxu0
  %v792 = vadd.f32 0.0, %v791
  %793 = vmatmul.f32.gmra.mxu0 %v730
  %v794 = vpop.f32.mrf.mxu0
  %v795 = vadd.f32 0.0, %v794
  %796 = vmatmul.f32.gmra.mxu0 %v733
  %v797 = vpop.f32.mrf.mxu0
  %v798 = vadd.f32 0.0, %v797
  %799 = vmatmul.f32.gmra.mxu0 %v736
  %v800 = vpop.f32.mrf.mxu0
  %v801 = vadd.f32 0.0, %v800
  %802 = vmatmul.f32.gmra.mxu0 %v739
  %v803 = vpop.f32.mrf.mxu0
  %v804 = vadd.f32 0.0, %v803
  %805 = vmatmul.f32.gmra.mxu0 %v742
  %v806 = vpop.f32.mrf.mxu0
  %v807 = vadd.f32 0.0, %v806
  %808 = vmatmul.f32.gmra.mxu0 %v745
  %v809 = vpop.f32.mrf.mxu0
  %v810 = vadd.f32 0.0, %v809
  %811 = vmatmul.f32.gmra.mxu0 %v748
  %v812 = vpop.f32.mrf.mxu0
  %v813 = vadd.f32 0.0, %v812
  %814 = vmatmul.f32.gmra.mxu0 %v751
  %v815 = vpop.f32.mrf.mxu0
  %v816 = vadd.f32 0.0, %v815
  %817 = vmatmul.f32.gmra.mxu0 %v754
  %v818 = vpop.f32.mrf.mxu0
  %v819 = vadd.f32 0.0, %v818
  %820 = vmatmul.f32.gmra.mxu0 %v757
  %v821 = vpop.f32.mrf.mxu0
  %v822 = vadd.f32 0.0, %v821
  %823 = vmatmul.f32.gmra.mxu0 %v760
  %v824 = vpop.f32.mrf.mxu0
  %v825 = vadd.f32 0.0, %v824
  %826 = vmatmul.f32.gmra.mxu0 %v763
  %v827 = vpop.f32.mrf.mxu0
  %v828 = vadd.f32 0.0, %v827
  %829 = vmatmul.f32.gmra.mxu0 %v766
  %v830 = vpop.f32.mrf.mxu0
  %v831 = vadd.f32 0.0, %v830
  %832 = vmatmul.f32.gmra.mxu0 %v769
  %v833 = vpop.f32.mrf.mxu0
  %v834 = vadd.f32 0.0, %v833
  %835 = vmatmul.f32.gmra.mxu0 %v772
  %v836 = vpop.f32.mrf.mxu0
  %v837 = vadd.f32 0.0, %v836
  %838 = vdwg.mxu0
  %839 = vmatpush.msra.mxu0 0.0
  %840 = vmatpush.msra.mxu0 0.0
  %841 = vmatpush.msra.mxu0 0.0
  %842 = vmatpush.msra.mxu0 0.0
  %843 = vmatpush.msra.mxu0 0.0
  %844 = vmatpush.msra.mxu0 0.0
  %845 = vmatpush.msra.mxu0 0.0
  %846 = vmatpush.msra.mxu0 0.0
  %847 = vmatpush.msra.mxu0 0.0
  %848 = vmatpush.msra.mxu0 0.0
  %849 = vmatpush.msra.mxu0 0.0
  %850 = vmatpush.msra.mxu0 0.0
  %851 = vmatpush.msra.mxu0 0.0
  %852 = vmatpush.msra.mxu0 0.0
  %853 = vmatpush.msra.mxu0 0.0
  %854 = vmatpush.msra.mxu0 %v29
  %855 = vmatmul.f32.gmra.mxu0 %v727
  %v856 = vpop.f32.mrf.mxu0
  %v857 = vadd.f32 0.0, %v856
  %858 = vmatmul.f32.gmra.mxu0 %v730
  %v859 = vpop.f32.mrf.mxu0
  %v860 = vadd.f32 0.0, %v859
  %861 = vmatmul.f32.gmra.mxu0 %v733
  %v862 = vpop.f32.mrf.mxu0
  %v863 = vadd.f32 0.0, %v862
  %864 = vmatmul.f32.gmra.mxu0 %v736
  %v865 = vpop.f32.mrf.mxu0
  %v866 = vadd.f32 0.0, %v865
  %867 = vmatmul.f32.gmra.mxu0 %v739
  %v868 = vpop.f32.mrf.mxu0
  %v869 = vadd.f32 0.0, %v868
  %870 = vmatmul.f32.gmra.mxu0 %v742
  %v871 = vpop.f32.mrf.mxu0
  %v872 = vadd.f32 0.0, %v871
  %873 = vmatmul.f32.gmra.mxu0 %v745
  %v874 = vpop.f32.mrf.mxu0
  %v875 = vadd.f32 0.0, %v874
  %876 = vmatmul.f32.gmra.mxu0 %v748
  %v877 = vpop.f32.mrf.mxu0
  %v878 = vadd.f32 0.0, %v877
  %879 = vmatmul.f32.gmra.mxu0 %v751
  %v880 = vpop.f32.mrf.mxu0
  %v881 = vadd.f32 0.0, %v880
  %882 = vmatmul.f32.gmra.mxu0 %v754
  %v883 = vpop.f32.mrf.mxu0
  %v884 = vadd.f32 0.0, %v883
  %885 = vmatmul.f32.gmra.mxu0 %v757
  %v886 = vpop.f32.mrf.mxu0
  %v887 = vadd.f32 0.0, %v886
  %888 = vmatmul.f32.gmra.mxu0 %v760
  %v889 = vpop.f32.mrf.mxu0
  %v890 = vadd.f32 0.0, %v889
  %891 = vmatmul.f32.gmra.mxu0 %v763
  %v892 = vpop.f32.mrf.mxu0
  %v893 = vadd.f32 0.0, %v892
  %894 = vmatmul.f32.gmra.mxu0 %v766
  %v895 = vpop.f32.mrf.mxu0
  %v896 = vadd.f32 0.0, %v895
  %897 = vmatmul.f32.gmra.mxu0 %v769
  %v898 = vpop.f32.mrf.mxu0
  %v899 = vadd.f32 0.0, %v898
  %900 = vmatmul.f32.gmra.mxu0 %v772
  %v901 = vpop.f32.mrf.mxu0
  %v902 = vadd.f32 0.0, %v901
  %903 = vdwg.mxu0
  %v904 = vmul.f32 %v211, %v792
  %v905 = vmul.f32 %v214, %v795
  %v906 = vmul.f32 %v217, %v798
  %v907 = vmul.f32 %v220, %v801
  %v908 = vmul.f32 %v223, %v804
  %v909 = vmul.f32 %v226, %v807
  %v910 = vmul.f32 %v229, %v810
  %v911 = vmul.f32 %v232, %v813
  %v912 = vmul.f32 %v235, %v816
  %v913 = vmul.f32 %v238, %v819
  %v914 = vmul.f32 %v241, %v822
  %v915 = vmul.f32 %v244, %v825
  %v916 = vmul.f32 %v247, %v828
  %v917 = vmul.f32 %v250, %v831
  %v918 = vmul.f32 %v253, %v834
  %v919 = vmul.f32 %v256, %v837
  %v920 = vmul.f32 %v276, %v857
  %v921 = vmul.f32 %v279, %v860
  %v922 = vmul.f32 %v282, %v863
  %v923 = vmul.f32 %v285, %v866
  %v924 = vmul.f32 %v288, %v869
  %v925 = vmul.f32 %v291, %v872
  %v926 = vmul.f32 %v294, %v875
  %v927 = vmul.f32 %v297, %v878
  %v928 = vmul.f32 %v300, %v881
  %v929 = vmul.f32 %v303, %v884
  %v930 = vmul.f32 %v306, %v887
  %v931 = vmul.f32 %v309, %v890
  %v932 = vmul.f32 %v312, %v893
  %v933 = vmul.f32 %v315, %v896
  %v934 = vmul.f32 %v318, %v899
  %v935 = vmul.f32 %v321, %v902
  %v936 = vadd.f32 %v904, %v920
  %v937 = vadd.f32 %v905, %v921
  %v938 = vadd.f32 %v906, %v922
  %v939 = vadd.f32 %v907, %v923
  %v940 = vadd.f32 %v908, %v924
  %v941 = vadd.f32 %v909, %v925
  %v942 = vadd.f32 %v910, %v926
  %v943 = vadd.f32 %v911, %v927
  %v944 = vadd.f32 %v912, %v928
  %v945 = vadd.f32 %v913, %v929
  %v946 = vadd.f32 %v914, %v930
  %v947 = vadd.f32 %v915, %v931
  %v948 = vadd.f32 %v916, %v932
  %v949 = vadd.f32 %v917, %v933
  %v950 = vadd.f32 %v918, %v934
  %v951 = vadd.f32 %v919, %v935
  %v952 = vmul.f32 %v501, %v936
  %v953 = vmul.f32 %v504, %v937
  %v954 = vmul.f32 %v507, %v938
  %v955 = vmul.f32 %v510, %v939
  %v956 = vmul.f32 %v513, %v940
  %v957 = vmul.f32 %v516, %v941
  %v958 = vmul.f32 %v519, %v942
  %v959 = vmul.f32 %v522, %v943
  %v960 = vmul.f32 %v525, %v944
  %v961 = vmul.f32 %v528, %v945
  %v962 = vmul.f32 %v531, %v946
  %v963 = vmul.f32 %v534, %v947
  %v964 = vmul.f32 %v537, %v948
  %v965 = vmul.f32 %v540, %v949
  %v966 = vmul.f32 %v543, %v950
  %v967 = vmul.f32 %v546, %v951
  %v968 = vmul.f32 %v211, %v857
  %v969 = vmul.f32 %v214, %v860
  %v970 = vmul.f32 %v217, %v863
  %v971 = vmul.f32 %v220, %v866
  %v972 = vmul.f32 %v223, %v869
  %v973 = vmul.f32 %v226, %v872
  %v974 = vmul.f32 %v229, %v875
  %v975 = vmul.f32 %v232, %v878
  %v976 = vmul.f32 %v235, %v881
  %v977 = vmul.f32 %v238, %v884
  %v978 = vmul.f32 %v241, %v887
  %v979 = vmul.f32 %v244, %v890
  %v980 = vmul.f32 %v247, %v893
  %v981 = vmul.f32 %v250, %v896
  %v982 = vmul.f32 %v253, %v899
  %v983 = vmul.f32 %v256, %v902
  %v984 = vmul.f32 %v276, %v792
  %v985 = vmul.f32 %v279, %v795
  %v986 = vmul.f32 %v282, %v798
  %v987 = vmul.f32 %v285, %v801
  %v988 = vmul.f32 %v288, %v804
  %v989 = vmul.f32 %v291, %v807
  %v990 = vmul.f32 %v294, %v810
  %v991 = vmul.f32 %v297, %v813
  %v992 = vmul.f32 %v300, %v816
  %v993 = vmul.f32 %v303, %v819
  %v994 = vmul.f32 %v306, %v822
  %v995 = vmul.f32 %v309, %v825
  %v996 = vmul.f32 %v312, %v828
  %v997 = vmul.f32 %v315, %v831
  %v998 = vmul.f32 %v318, %v834
  %v999 = vmul.f32 %v321, %v837
  %v1000 = vsub.f32 %v968, %v984
  %v1001 = vsub.f32 %v969, %v985
  %v1002 = vsub.f32 %v970, %v986
  %v1003 = vsub.f32 %v971, %v987
  %v1004 = vsub.f32 %v972, %v988
  %v1005 = vsub.f32 %v973, %v989
  %v1006 = vsub.f32 %v974, %v990
  %v1007 = vsub.f32 %v975, %v991
  %v1008 = vsub.f32 %v976, %v992
  %v1009 = vsub.f32 %v977, %v993
  %v1010 = vsub.f32 %v978, %v994
  %v1011 = vsub.f32 %v979, %v995
  %v1012 = vsub.f32 %v980, %v996
  %v1013 = vsub.f32 %v981, %v997
  %v1014 = vsub.f32 %v982, %v998
  %v1015 = vsub.f32 %v983, %v999
  %v1016 = vmul.f32 %v566, %v1000
  %v1017 = vmul.f32 %v569, %v1001
  %v1018 = vmul.f32 %v572, %v1002
  %v1019 = vmul.f32 %v575, %v1003
  %v1020 = vmul.f32 %v578, %v1004
  %v1021 = vmul.f32 %v581, %v1005
  %v1022 = vmul.f32 %v584, %v1006
  %v1023 = vmul.f32 %v587, %v1007
  %v1024 = vmul.f32 %v590, %v1008
  %v1025 = vmul.f32 %v593, %v1009
  %v1026 = vmul.f32 %v596, %v1010
  %v1027 = vmul.f32 %v599, %v1011
  %v1028 = vmul.f32 %v602, %v1012
  %v1029 = vmul.f32 %v605, %v1013
  %v1030 = vmul.f32 %v608, %v1014
  %v1031 = vmul.f32 %v611, %v1015
  %v1032 = vadd.f32 %v952, %v1016
  %v1033 = vadd.f32 %v953, %v1017
  %v1034 = vadd.f32 %v954, %v1018
  %v1035 = vadd.f32 %v955, %v1019
  %v1036 = vadd.f32 %v956, %v1020
  %v1037 = vadd.f32 %v957, %v1021
  %v1038 = vadd.f32 %v958, %v1022
  %v1039 = vadd.f32 %v959, %v1023
  %v1040 = vadd.f32 %v960, %v1024
  %v1041 = vadd.f32 %v961, %v1025
  %v1042 = vadd.f32 %v962, %v1026
  %v1043 = vadd.f32 %v963, %v1027
  %v1044 = vadd.f32 %v964, %v1028
  %v1045 = vadd.f32 %v965, %v1029
  %v1046 = vadd.f32 %v966, %v1030
  %v1047 = vadd.f32 %v967, %v1031
  %1048 = vadd.xlane.f32.xlu0 %v1032
  %v1049 = vpop.xlane.xlu0 %1048
  %1050 = vadd.xlane.f32.xlu0 %v1033
  %v1051 = vpop.xlane.xlu0 %1050
  %1052 = vadd.xlane.f32.xlu0 %v1034
  %v1053 = vpop.xlane.xlu0 %1052
  %1054 = vadd.xlane.f32.xlu0 %v1035
  %v1055 = vpop.xlane.xlu0 %1054
  %1056 = vadd.xlane.f32.xlu0 %v1036
  %v1057 = vpop.xlane.xlu0 %1056
  %1058 = vadd.xlane.f32.xlu0 %v1037
  %v1059 = vpop.xlane.xlu0 %1058
  %1060 = vadd.xlane.f32.xlu0 %v1038
  %v1061 = vpop.xlane.xlu0 %1060
  %1062 = vadd.xlane.f32.xlu0 %v1039
  %v1063 = vpop.xlane.xlu0 %1062
  %1064 = vadd.xlane.f32.xlu0 %v1040
  %v1065 = vpop.xlane.xlu0 %1064
  %1066 = vadd.xlane.f32.xlu0 %v1041
  %v1067 = vpop.xlane.xlu0 %1066
  %1068 = vadd.xlane.f32.xlu0 %v1042
  %v1069 = vpop.xlane.xlu0 %1068
  %1070 = vadd.xlane.f32.xlu0 %v1043
  %v1071 = vpop.xlane.xlu0 %1070
  %1072 = vadd.xlane.f32.xlu0 %v1044
  %v1073 = vpop.xlane.xlu0 %1072
  %1074 = vadd.xlane.f32.xlu0 %v1045
  %v1075 = vpop.xlane.xlu0 %1074
  %1076 = vadd.xlane.f32.xlu0 %v1046
  %v1077 = vpop.xlane.xlu0 %1076
  %1078 = vadd.xlane.f32.xlu0 %v1047
  %v1079 = vpop.xlane.xlu0 %1078
  %vm1080 = vcmask 7168
  %1081 = vst.msk [vmem:[%s5] sm:$0xff] %vm1080, %v1049
  %1082 = vst.msk [vmem:[%s5 + $0x8] sm:$0xff] %vm1080, %v1051
  %1083 = vst.msk [vmem:[%s5 + $0x10] sm:$0xff] %vm1080, %v1053
  %1084 = vst.msk [vmem:[%s5 + $0x18] sm:$0xff] %vm1080, %v1055
  %1085 = vst.msk [vmem:[%s5 + $0x20] sm:$0xff] %vm1080, %v1057
  %1086 = vst.msk [vmem:[%s5 + $0x28] sm:$0xff] %vm1080, %v1059
  %1087 = vst.msk [vmem:[%s5 + $0x30] sm:$0xff] %vm1080, %v1061
  %1088 = vst.msk [vmem:[%s5 + $0x38] sm:$0xff] %vm1080, %v1063
  %1089 = vst.msk [vmem:[%s5 + $0x40] sm:$0xff] %vm1080, %v1065
  %1090 = vst.msk [vmem:[%s5 + $0x48] sm:$0xff] %vm1080, %v1067
  %1091 = vst.msk [vmem:[%s5 + $0x50] sm:$0xff] %vm1080, %v1069
  %1092 = vst.msk [vmem:[%s5 + $0x58] sm:$0xff] %vm1080, %v1071
  %1093 = vst.msk [vmem:[%s5 + $0x60] sm:$0xff] %vm1080, %v1073
  %1094 = vst.msk [vmem:[%s5 + $0x68] sm:$0xff] %vm1080, %v1075
  %1095 = vst.msk [vmem:[%s5 + $0x70] sm:$0xff] %vm1080, %v1077
  %1096 = vst.msk [vmem:[%s5 + $0x78] sm:$0xff] %vm1080, %v1079
  // Predicated region
  $region22: #{tpu_custom_call.1} parent=0 // pred_check
    _
  $region23: #{tpu_custom_call.1} parent=0 // pred_check_branch
    %1098 = sbr.rel (0) target = $region25
  $region24: #{tpu_custom_call.1} parent=0 // pred_region
    _
  $region25: #{tpu_custom_call.1} parent=0 // pred_fallthru
    _
  // Predicated region
  $region26: #{tpu_custom_call.1} parent=0 // pred_check
    _
  $region27: #{tpu_custom_call.1} parent=0 // pred_check_branch
    %1100 = sbr.rel (0) target = $region29
  $region28: #{tpu_custom_call.1} parent=0 // pred_region
    _
  $region29: #{tpu_custom_call.1} parent=0 // pred_fallthru
    _

</llo_original>
